<compile_context>
chip_gen: v6e
topology: v6e:2x2x1
jax: 0.10.0
libtpu: 0.0.40
codegen_flags: <defaults>
</compile_context>

<pallas_src>
import jax
import jax.numpy as jnp
from jax import lax
from jax.experimental import pallas as pl
from jax.experimental.pallas import tpu as pltpu

SIZE = 32            # small stand-in for the module's SIZE=256 (H2*W2 multiple of 128)
BATCH = 2
CIN = 3              # conv1 input channels (undefined in __init__; RGB classifier)
COUT = 16            # implied by x.view(-1, 16 * (SIZE//2)**2)
K = 3                # 3x3 conv, padding=1 (spatial preserving, implied by the view)
NUM_CLASSES = 10     # fc1 output features (undefined in __init__)
KPAD = 32            # im2col K (=27) padded to a sublane-aligned 32
NCLS_PAD = 16        # fc1 classes padded 10 -> 16 (sublane aligned), NOT 128


def _largest_div(n, candidates):
    for c in candidates:
        if c <= n and n % c == 0:
            return c
    return n


# ---------------- Pallas kernels ----------------

def conv_relu_pool_kernel(pt_ref, w_ref, b_ref, o_ref):
    # pt_ref: (1, 4*KPAD, tile_p) bf16 -- the 4 pool-window positions merged onto K
    # w_ref : (4*COUT, 4*KPAD) bf16    -- block-diagonal conv weight
    # b_ref : (COUT, 1) f32
    # o_ref : (1, COUT, tile_p) bf16   -- lane-dense pooled output (NCHW flatten order)
    y = jnp.dot(w_ref[...], pt_ref[0], preferred_element_type=jnp.float32)  # (64, P)
    # max over the 4 pool-window groups: sublane-aligned 16-row slices, VPU only.
    m = jnp.maximum(jnp.maximum(y[0:COUT], y[COUT:2 * COUT]),
                    jnp.maximum(y[2 * COUT:3 * COUT], y[3 * COUT:4 * COUT]))
    # relu(max_w(conv) + b) == maxpool(relu(conv + b)) since bias is window-invariant.
    o_ref[0] = jnp.maximum(m + b_ref[...], 0.0).astype(o_ref.dtype)


def fc_kernel(x_ref, w_ref, o_ref, acc_ref):
    # x_ref: (B, tk) bf16;  w_ref: (NCLS_PAD, tk) bf16 (Kin on the lane axis);
    # o_ref: (1, B, NCLS_PAD) f32 partial sum;  acc_ref: (B, NCLS_PAD) f32.
    k = pl.program_id(1)

    @pl.when(k == 0)
    def _():
        acc_ref[...] = jnp.zeros_like(acc_ref)

    acc_ref[...] += lax.dot_general(
        x_ref[...], w_ref[...],
        dimension_numbers=(((1,), (1,)), ((), ())),
        preferred_element_type=jnp.float32)

    @pl.when(k == pl.num_programs(1) - 1)
    def _():
        o_ref[0] = acc_ref[...]


# ---------------- wrappers ----------------

def conv_relu_pool(patches, w_bd, bias):
    # patches: (B, 4*KPAD, H2*W2) bf16, w_bd: (4*COUT, 4*KPAD) bf16, bias: (COUT,1) f32
    Bn, kdim, hw2 = patches.shape
    cout4 = w_bd.shape[0]
    cout = cout4 // 4
    # Cap at 2048 lanes so the patch DMA pipelines (multiple grid steps per image).
    tile_p = _largest_div(hw2, (2048, 1024, 512, 256, 128))
    return pl.pallas_call(
        conv_relu_pool_kernel,
        out_shape=jax.ShapeDtypeStruct((Bn, cout, hw2), jnp.bfloat16),
        grid=(Bn, hw2 // tile_p),
        in_specs=[
            pl.BlockSpec((1, kdim, tile_p), lambda b, t: (b, 0, t)),
            pl.BlockSpec((cout4, kdim), lambda b, t: (0, 0)),
            pl.BlockSpec((cout, 1), lambda b, t: (0, 0)),
        ],
        out_specs=pl.BlockSpec((1, cout, tile_p), lambda b, t: (b, 0, t)),
        compiler_params=pltpu.CompilerParams(
            dimension_semantics=("parallel", "parallel"),
            vmem_limit_bytes=32 * 1024 * 1024),
    )(patches, w_bd, bias)


def linear_tn(x, w_t):
    # x: (B, Kin) bf16, w_t: (NCLS_PAD, Kin) bf16.
    # Returns (2, B, NCLS_PAD) f32 partial sums: the K reduction is split in two
    # "parallel" halves so both v7x TensorCores stream half the weight each.
    Bn, kin = x.shape
    ncls = w_t.shape[0]
    assert kin % 2 == 0
    kin_half = kin // 2
    tk = _largest_div(kin_half, (8192, 4096, 2048, 1024, 512, 256, 128))
    nk = kin_half // tk
    return pl.pallas_call(
        fc_kernel,
        out_shape=jax.ShapeDtypeStruct((2, Bn, ncls), jnp.float32),
        grid=(2, nk),
        in_specs=[
            pl.BlockSpec((Bn, tk), lambda p, k: (0, p * nk + k)),
            pl.BlockSpec((ncls, tk), lambda p, k: (0, p * nk + k)),
        ],
        out_specs=pl.BlockSpec((1, Bn, ncls), lambda p, k: (p, 0, 0)),
        scratch_shapes=[pltpu.VMEM((Bn, ncls), jnp.float32)],
        compiler_params=pltpu.CompilerParams(
            dimension_semantics=("parallel", "arbitrary"),
            vmem_limit_bytes=32 * 1024 * 1024),
    )(x, w_t)


def main_model_forward(x_nchw, params):
    B, C, H, W = x_nchw.shape
    assert H % 2 == 0 and W % 2 == 0
    H2, W2 = H // 2, W // 2
    kkc = K * K * C

    # glue: NCHW -> NHWC, zero-pad, im2col, group the 4 members of each 2x2 pool
    # window onto the (merged, padded) K axis with the pooled spatial index
    # lane-dense last.  One XLA data-movement pass over the input.
    x = jnp.transpose(x_nchw, (0, 2, 3, 1))
    xp = jnp.pad(x, ((0, 0), (1, 1), (1, 1), (0, 0)))
    cols = [xp[:, dy:dy + H, dx:dx + W, :] for dy in range(K) for dx in range(K)]
    patches = jnp.stack(cols, axis=3).reshape(B, H2, 2, W2, 2, kkc)
    patches = jnp.transpose(patches, (0, 2, 4, 5, 1, 3)).reshape(B, 4, kkc, H2 * W2)
    patches = jnp.pad(patches, ((0, 0), (0, 0), (0, KPAD - kkc), (0, 0)))
    patches = patches.reshape(B, 4 * KPAD, H2 * W2).astype(jnp.bfloat16)

    # fused conv1 + bias + ReLU + 2x2 maxpool (single block-diagonal matmul per
    # tile); output is already in NCHW (B, COUT, H2*W2) flatten order, so the
    # torch-style x.view(...) is a free contiguous reshape.
    pooled = conv_relu_pool(patches, params["conv_w_bd"], params["conv_b"])
    flat = pooled.reshape(B, COUT * H2 * W2)

    # fc1: K-tiled with f32 accumulator; two per-core partial sums added here,
    # bias added here, classes sliced 0:NUM_CLASSES here.
    partials = linear_tn(flat, params["fc_w_t"])
    out = partials[0] + partials[1]
    return out[:, :NUM_CLASSES] + params["fc_b"]


# ---------------- reference (matches the bf16-operand / f32-accum pipeline) ----------------

def reference_forward(x_nchw, conv_w_oihw, conv_b, fc_w, fc_b):
    bf = lambda a: a.astype(jnp.bfloat16).astype(jnp.float32)
    y = lax.conv_general_dilated(
        bf(x_nchw), bf(conv_w_oihw), (1, 1), ((1, 1), (1, 1)),
        dimension_numbers=("NCHW", "OIHW", "NCHW"),
        precision=lax.Precision.HIGHEST)
    y = jnp.maximum(y + conv_b.reshape(1, COUT, 1, 1), 0.0)
    y = lax.reduce_window(y, -jnp.inf, lax.max,
                          (1, 1, 2, 2), (1, 1, 2, 2), "VALID")
    flat = bf(y).reshape(y.shape[0], -1)
    return jnp.dot(flat, bf(fc_w), precision=lax.Precision.HIGHEST) + fc_b


if __name__ == "__main__":
    key = jax.random.PRNGKey(0)
    k1, k2, k3 = jax.random.split(key, 3)

    # deterministic parameter init (init_weights 'norm': N(0, 0.02), zero bias)
    conv_w_oihw = jax.random.normal(k1, (COUT, CIN, K, K), jnp.float32) * 0.02
    conv_b = jnp.zeros((COUT, 1), jnp.float32)
    kkc = K * K * CIN
    w_flat = jnp.transpose(conv_w_oihw, (0, 2, 3, 1)).reshape(COUT, kkc)  # (ky,kx,cin)
    w_flat = jnp.pad(w_flat, ((0, 0), (0, KPAD - kkc)))
    # block-diagonal weight: one copy of W per 2x2 pool-window position.
    w_bd = jnp.zeros((4 * COUT, 4 * KPAD), jnp.float32)
    for i in range(4):
        w_bd = w_bd.at[i * COUT:(i + 1) * COUT, i * KPAD:(i + 1) * KPAD].set(w_flat)
    w_bd = w_bd.astype(jnp.bfloat16)

    fc_in = COUT * (SIZE // 2) * (SIZE // 2)
    fc_w = jax.random.normal(k2, (fc_in, NUM_CLASSES), jnp.float32) * 0.02
    fc_b = jnp.zeros((NUM_CLASSES,), jnp.float32)
    # fc1 weight stored transposed, classes padded only 10 -> 16, Kin on lanes.
    fc_w_t = jnp.pad(fc_w.T, ((0, NCLS_PAD - NUM_CLASSES), (0, 0))).astype(jnp.bfloat16)

    params = dict(conv_w_bd=w_bd, conv_b=conv_b, fc_w_t=fc_w_t, fc_b=fc_b)

    x = jax.random.normal(k3, (BATCH, CIN, SIZE, SIZE), jnp.float32)

    out = jax.jit(main_model_forward)(x, params)
    out = jax.block_until_ready(out)
    assert out.shape == (BATCH, NUM_CLASSES)

    ref = reference_forward(x, conv_w_oihw, conv_b, fc_w, fc_b)
    assert jnp.allclose(out, ref, atol=1e-3, rtol=1e-3), "mismatch vs JAX reference"

    print("KERNEL_OK")
</pallas_src>

<mosaic_0001>
module attributes {stable_mosaic.version = 11 : i64} {
  func.func @conv_relu_pool_kernel(%arg0: i32, %arg1: i32, %arg2: memref<1x128x256xbf16, #tpu.memory_space<vmem>>, %arg3: memref<64x128xbf16, #tpu.memory_space<vmem>>, %arg4: memref<16x1xf32, #tpu.memory_space<vmem>>, %arg5: memref<1x16x256xbf16, #tpu.memory_space<vmem>>) attributes {dimension_semantics = [#tpu.dimension_semantics<parallel>, #tpu.dimension_semantics<parallel>], iteration_bounds = array<i64: 2, 1>, scalar_prefetch = 0 : i64, scratch_operands = 0 : i64, tpu.core_type = #tpu.core_type<tc>, window_params = [{transform_indices = @transform_0, window_bounds = array<i64: 1, 128, 256>}, {pipeline_mode = #tpu.pipeline_mode<synchronous>, transform_indices = @transform_1, window_bounds = array<i64: 64, 128>}, {pipeline_mode = #tpu.pipeline_mode<synchronous>, transform_indices = @transform_2, window_bounds = array<i64: 16, 1>}, {transform_indices = @transform_3, window_bounds = array<i64: 1, 16, 256>}]} {
    %c0 = arith.constant 0 : index
    %c0_0 = arith.constant 0 : index
    %0 = vector.load %arg3[%c0, %c0_0] : memref<64x128xbf16, #tpu.memory_space<vmem>>, vector<64x128xbf16>
    %c0_1 = arith.constant 0 : index
    %c0_2 = arith.constant 0 : index
    %c0_3 = arith.constant 0 : index
    %1 = vector.load %arg2[%c0_1, %c0_2, %c0_3] : memref<1x128x256xbf16, #tpu.memory_space<vmem>>, vector<1x128x256xbf16>
    %2 = vector.shape_cast %1 : vector<1x128x256xbf16> to vector<128x256xbf16>
    %cst = arith.constant dense<0.000000e+00> : vector<64x256xf32>
    %3 = tpu.matmul %0, %2, %cst {dimension_numbers = #tpu.dot_dimension_numbers<[1], [0], [0], [1], [0, 0, 1, 1], [], []>} : vector<64x128xbf16>, vector<128x256xbf16>, vector<64x256xf32> -> vector<64x256xf32>
    %4 = vector.extract_strided_slice %3 {offsets = [0, 0], sizes = [16, 256], strides = [1, 1]} : vector<64x256xf32> to vector<16x256xf32>
    %5 = vector.extract_strided_slice %3 {offsets = [16, 0], sizes = [16, 256], strides = [1, 1]} : vector<64x256xf32> to vector<16x256xf32>
    %6 = arith.maximumf %4, %5 : vector<16x256xf32>
    %7 = vector.extract_strided_slice %3 {offsets = [32, 0], sizes = [16, 256], strides = [1, 1]} : vector<64x256xf32> to vector<16x256xf32>
    %8 = vector.extract_strided_slice %3 {offsets = [48, 0], sizes = [16, 256], strides = [1, 1]} : vector<64x256xf32> to vector<16x256xf32>
    %9 = arith.maximumf %7, %8 : vector<16x256xf32>
    %10 = arith.maximumf %6, %9 : vector<16x256xf32>
    %c0_4 = arith.constant 0 : index
    %c0_5 = arith.constant 0 : index
    %11 = vector.load %arg4[%c0_4, %c0_5] : memref<16x1xf32, #tpu.memory_space<vmem>>, vector<16x1xf32>
    %12 = vector.broadcast %11 : vector<16x1xf32> to vector<16x256xf32>
    %13 = arith.addf %10, %12 : vector<16x256xf32>
    %cst_6 = arith.constant 0.000000e+00 : f32
    %14 = vector.broadcast %cst_6 : f32 to vector<16x256xf32>
    %15 = arith.maximumf %13, %14 : vector<16x256xf32>
    %16 = arith.truncf %15 : vector<16x256xf32> to vector<16x256xbf16>
    %c0_7 = arith.constant 0 : index
    %c0_8 = arith.constant 0 : index
    %c0_9 = arith.constant 0 : index
    %17 = vector.load %arg5[%c0_7, %c0_8, %c0_9] : memref<1x16x256xbf16, #tpu.memory_space<vmem>>, vector<1x16x256xbf16>
    %18 = vector.shape_cast %17 : vector<1x16x256xbf16> to vector<16x256xbf16>
    %19 = vector.shape_cast %16 : vector<16x256xbf16> to vector<1x16x256xbf16>
    tpu.vector_store %arg5[%c0_7, %c0_8, %c0_9], %19 {strides = array<i32>} : memref<1x16x256xbf16, #tpu.memory_space<vmem>>, vector<1x16x256xbf16>,
    return
  }
  func.func @transform_0(%arg0: i32, %arg1: i32) -> (i32, i32, i32) {
    %c0_i32 = arith.constant 0 : i32
    %c0_i32_0 = arith.constant 0 : i32
    return %arg0, %c0_i32, %arg1 : i32, i32, i32
  }
  func.func @transform_1(%arg0: i32, %arg1: i32) -> (i32, i32) {
    %c0_i32 = arith.constant 0 : i32
    %c0_i32_0 = arith.constant 0 : i32
    %c0_i32_1 = arith.constant 0 : i32
    return %c0_i32, %c0_i32_0 : i32, i32
  }
  func.func @transform_2(%arg0: i32, %arg1: i32) -> (i32, i32) {
    %c0_i32 = arith.constant 0 : i32
    %c0_i32_0 = arith.constant 0 : i32
    %c0_i32_1 = arith.constant 0 : i32
    return %c0_i32, %c0_i32_0 : i32, i32
  }
  func.func @transform_3(%arg0: i32, %arg1: i32) -> (i32, i32, i32) {
    %c0_i32 = arith.constant 0 : i32
    %c0_i32_0 = arith.constant 0 : i32
    return %arg0, %c0_i32, %arg1 : i32, i32, i32
  }
}

module attributes {stable_mosaic.version = 11 : i64} {
  func.func @fc_kernel(%arg0: i32, %arg1: i32, %arg2: memref<2x2048xbf16, #tpu.memory_space<vmem>>, %arg3: memref<16x2048xbf16, #tpu.memory_space<vmem>>, %arg4: memref<1x2x16xf32, #tpu.memory_space<vmem>>, %arg5: memref<2x16xf32, #tpu.memory_space<vmem>>) attributes {dimension_semantics = [#tpu.dimension_semantics<parallel>, #tpu.dimension_semantics<arbitrary>], iteration_bounds = array<i64: 2, 1>, scalar_prefetch = 0 : i64, scratch_operands = 1 : i64, tpu.core_type = #tpu.core_type<tc>, window_params = [{transform_indices = @transform_0, window_bounds = array<i64: 2, 2048>}, {transform_indices = @transform_1, window_bounds = array<i64: 16, 2048>}, {transform_indices = @transform_2, window_bounds = array<i64: 1, 2, 16>}]} {
    %c0_i32 = arith.constant 0 : i32
    %0 = arith.cmpi eq, %arg1, %c0_i32 : i32
    %1 = arith.extui %0 : i1 to i32
    %c0_i32_0 = arith.constant 0 : i32
    %2 = arith.cmpi ne, %1, %c0_i32_0 : i32
    scf.if %2 {
      %cst_10 = arith.constant 0.000000e+00 : f32
      %12 = vector.broadcast %cst_10 : f32 to vector<2x16xf32>
      %c0_11 = arith.constant 0 : index
      %c0_12 = arith.constant 0 : index
      %13 = vector.load %arg5[%c0_11, %c0_12] : memref<2x16xf32, #tpu.memory_space<vmem>>, vector<2x16xf32>
      tpu.vector_store %arg5[%c0_11, %c0_12], %12 {strides = array<i32>} : memref<2x16xf32, #tpu.memory_space<vmem>>, vector<2x16xf32>,
    } else {
    }
    %c0 = arith.constant 0 : index
    %c0_1 = arith.constant 0 : index
    %3 = vector.load %arg5[%c0, %c0_1] : memref<2x16xf32, #tpu.memory_space<vmem>>, vector<2x16xf32>
    %c0_2 = arith.constant 0 : index
    %c0_3 = arith.constant 0 : index
    %4 = vector.load %arg2[%c0_2, %c0_3] : memref<2x2048xbf16, #tpu.memory_space<vmem>>, vector<2x2048xbf16>
    %c0_4 = arith.constant 0 : index
    %c0_5 = arith.constant 0 : index
    %5 = vector.load %arg3[%c0_4, %c0_5] : memref<16x2048xbf16, #tpu.memory_space<vmem>>, vector<16x2048xbf16>
    %cst = arith.constant dense<0.000000e+00> : vector<2x16xf32>
    %6 = tpu.matmul %4, %5, %cst {dimension_numbers = #tpu.dot_dimension_numbers<[1], [1], [0], [0], [0, 0, 1, 0], [], []>} : vector<2x2048xbf16>, vector<16x2048xbf16>, vector<2x16xf32> -> vector<2x16xf32>
    %7 = arith.addf %3, %6 : vector<2x16xf32>
    %c0_6 = arith.constant 0 : index
    %c0_7 = arith.constant 0 : index
    %8 = vector.load %arg5[%c0_6, %c0_7] : memref<2x16xf32, #tpu.memory_space<vmem>>, vector<2x16xf32>
    tpu.vector_store %arg5[%c0_6, %c0_7], %7 {strides = array<i32>} : memref<2x16xf32, #tpu.memory_space<vmem>>, vector<2x16xf32>,
    %c0_i32_8 = arith.constant 0 : i32
    %9 = arith.cmpi eq, %arg1, %c0_i32_8 : i32
    %10 = arith.extui %9 : i1 to i32
    %c0_i32_9 = arith.constant 0 : i32
    %11 = arith.cmpi ne, %10, %c0_i32_9 : i32
    scf.if %11 {
      %c0_10 = arith.constant 0 : index
      %c0_11 = arith.constant 0 : index
      %12 = vector.load %arg5[%c0_10, %c0_11] : memref<2x16xf32, #tpu.memory_space<vmem>>, vector<2x16xf32>
      %c0_12 = arith.constant 0 : index
      %c0_13 = arith.constant 0 : index
      %c0_14 = arith.constant 0 : index
      %13 = vector.load %arg4[%c0_12, %c0_13, %c0_14] : memref<1x2x16xf32, #tpu.memory_space<vmem>>, vector<1x2x16xf32>
      %14 = vector.shape_cast %13 : vector<1x2x16xf32> to vector<2x16xf32>
      %15 = vector.shape_cast %12 : vector<2x16xf32> to vector<1x2x16xf32>
      tpu.vector_store %arg4[%c0_12, %c0_13, %c0_14], %15 {strides = array<i32>} : memref<1x2x16xf32, #tpu.memory_space<vmem>>, vector<1x2x16xf32>,
    } else {
    }
    return
  }
  func.func @transform_0(%arg0: i32, %arg1: i32) -> (i32, i32) {
    %c1_i32 = arith.constant 1 : i32
    %0 = arith.muli %arg0, %c1_i32 : i32
    %1 = arith.addi %0, %arg1 : i32
    %c0_i32 = arith.constant 0 : i32
    %c0_i32_0 = arith.constant 0 : i32
    return %c0_i32, %1 : i32, i32
  }
  func.func @transform_1(%arg0: i32, %arg1: i32) -> (i32, i32) {
    %c1_i32 = arith.constant 1 : i32
    %0 = arith.muli %arg0, %c1_i32 : i32
    %1 = arith.addi %0, %arg1 : i32
    %c0_i32 = arith.constant 0 : i32
    %c0_i32_0 = arith.constant 0 : i32
    return %c0_i32, %1 : i32, i32
  }
  func.func @transform_2(%arg0: i32, %arg1: i32) -> (i32, i32, i32) {
    %c0_i32 = arith.constant 0 : i32
    %c0_i32_0 = arith.constant 0 : i32
    %c0_i32_1 = arith.constant 0 : i32
    return %arg0, %c0_i32, %c0_i32_0 : i32, i32, i32
  }
}

</mosaic_0001>

<llo_original>
// kernel: main_model_forward.2
$region0: #{main_model_forward.2}
  #allocation0 [shape = 'u32[]', space=smem, size = 0x4, offset = 0x4, fixed_abs, tag = 'smem constant byte address 0x4 - core index']
  #allocation1 [shape = 'u32[144,128]{1,0:T(1,128)}', space=vmem, size = 0x12000, scoped, tag = 'internal scratch']
  %s0 = inlined_call_operand.vmem [shape: bf16[2,128,256], index: 0, kind: input, shape index: {}]
  %s1 = inlined_call_operand.vmem [shape: bf16[64,128], index: 1, kind: input, shape index: {}]
  %s2 = inlined_call_operand.vmem [shape: f32[16,1], index: 2, kind: input, shape index: {}]
  %s3 = inlined_call_operand.vmem [shape: bf16[2,16,256], index: 3, kind: output, shape index: {}]
  %s4 = sld [smem:[#allocation0]]
  $region45: #{main_model_forward.2} parent=0
    _
  %s6 = ssub.s32 1, %s4
  %s7 = scalar_select 0, %s6, %s4
  loop: start=0, step=1, limit=4
  $region2: #{main_model_forward.2} parent=0 // loop_pre_header
    _
  $region3: #{main_model_forward.2} parent=0 // loop_header
    %s9 = sphi 0, %s13
    %p10 = scmp.ge.s32.totalorder %s9, 4
    %s16 = sphi 0, %s28
    %s17 = sphi 0, %s24
    %s18 = sphi 0, %s16
    %s19 = sphi 0, %s17
    %s20 = sphi 0, %s18
    %s21 = sphi 0, %s19
    %s33 = sphi 0, %s35
    %s36 = sphi 0, %s33
    %s37 = sphi 0, %s36
    %s53 = sphi 0, %s37
    %s57 = sphi 0, %s57
    %s59 = sphi 0, %s57
    %s60 = sphi 0, %s59
    %s74 = sphi 0, %s60
    %s78 = sphi 0, %s78
    %s80 = sphi 0, %s78
    %s81 = sphi 0, %s80
    %s95 = sphi 0, %s81
    %s103 = sphi 0, %s105
    %s106 = sphi 0, %s103
    %s107 = sphi 0, %s106
    %s123 = sphi 0, %s107
  $region4: #{main_model_forward.2} parent=0 // loop_header_branch
    %12 = sbr.rel (%p10) target = $region8
  $region5: #{main_model_forward.2} parent=0 // loop_body
    %s14 = ssub.s32 %s9, 1
    %s15 = ssub.s32 %s9, 2
    %s22 = sadd.s32 1, %s17
    %p23 = scmp.ge.s32.totalorder %s22, 1
    %s24 = scalar_select %p23, 0, %s22
    %s25 = sadd.s32 1, %s16
    %s26 = scalar_select %p23, %s25, %s16
    %p27 = scmp.ge.s32.totalorder %s26, 2
    %s28 = scalar_select %p27, 0, %s26
    %s29 = ssub.s32 %s16, %s28
    %s30 = ssub.s32 %s17, %s24
    %s31 = sor.u32 %s29, %s30
    %p32 = scmp.eq.s32.totalorder %s31, 0
    %s34 = sadd.s32 %s33, 1
    %s35 = scalar_select %p32, %s33, %s34
    %p38 = pneg %p32
    %p39 = scmp.eq.s32.totalorder %s9, 1
    %p40 = por %p38, %p39
    %p41 = scmp.ne.s32.totalorder %s33, %s36
    %p42 = scmp.eq.s32.totalorder %s9, 0
    %p43 = por %p41, %p42
    %p44 = scmp.ne.s32.totalorder %s33, %s36
    %p45 = scmp.eq.s32.totalorder %s14, 1
    %p46 = por %p44, %p45
    %p47 = scmp.ne.s32.totalorder %s36, %s37
    %p48 = scmp.eq.s32.totalorder %s14, 0
    %p49 = por %p47, %p48
    %p50 = scmp.ne.s32.totalorder %s36, %s37
    %p51 = scmp.eq.s32.totalorder %s15, 1
    %p52 = por %p50, %p51
    %p54 = scmp.ne.s32.totalorder %s37, %s53
    %p55 = scmp.eq.s32.totalorder %s15, 0
    %p56 = por %p54, %p55
    %s58 = sadd.s32 %s57, 1
    %p61 = scmp.eq.s32.totalorder %s9, 1
    %p62 = scmp.ne.s32.totalorder %s57, %s59
    %p63 = scmp.eq.s32.totalorder %s9, 0
    %p64 = por %p62, %p63
    %p65 = scmp.ne.s32.totalorder %s57, %s59
    %p66 = scmp.eq.s32.totalorder %s14, 1
    %p67 = por %p65, %p66
    %p68 = scmp.ne.s32.totalorder %s59, %s60
    %p69 = scmp.eq.s32.totalorder %s14, 0
    %p70 = por %p68, %p69
    %p71 = scmp.ne.s32.totalorder %s59, %s60
    %p72 = scmp.eq.s32.totalorder %s15, 1
    %p73 = por %p71, %p72
    %p75 = scmp.ne.s32.totalorder %s60, %s74
    %p76 = scmp.eq.s32.totalorder %s15, 0
    %p77 = por %p75, %p76
    %s79 = sadd.s32 %s78, 1
    %p82 = scmp.eq.s32.totalorder %s9, 1
    %p83 = scmp.ne.s32.totalorder %s78, %s80
    %p84 = scmp.eq.s32.totalorder %s9, 0
    %p85 = por %p83, %p84
    %p86 = scmp.ne.s32.totalorder %s78, %s80
    %p87 = scmp.eq.s32.totalorder %s14, 1
    %p88 = por %p86, %p87
    %p89 = scmp.ne.s32.totalorder %s80, %s81
    %p90 = scmp.eq.s32.totalorder %s14, 0
    %p91 = por %p89, %p90
    %p92 = scmp.ne.s32.totalorder %s80, %s81
    %p93 = scmp.eq.s32.totalorder %s15, 1
    %p94 = por %p92, %p93
    %p96 = scmp.ne.s32.totalorder %s81, %s95
    %p97 = scmp.eq.s32.totalorder %s15, 0
    %p98 = por %p96, %p97
    %s99 = ssub.s32 %s16, %s28
    %s100 = ssub.s32 %s17, %s24
    %s101 = sor.u32 %s99, %s100
    %p102 = scmp.eq.s32.totalorder %s101, 0
    %s104 = sadd.s32 %s103, 1
    %s105 = scalar_select %p102, %s103, %s104
    %p108 = pneg %p102
    %p109 = scmp.eq.s32.totalorder %s9, 1
    %p110 = por %p108, %p109
    %p111 = scmp.ne.s32.totalorder %s103, %s106
    %p112 = scmp.eq.s32.totalorder %s9, 0
    %p113 = por %p111, %p112
    %p114 = scmp.ne.s32.totalorder %s103, %s106
    %p115 = scmp.eq.s32.totalorder %s14, 1
    %p116 = por %p114, %p115
    %p117 = scmp.ne.s32.totalorder %s106, %s107
    %p118 = scmp.eq.s32.totalorder %s14, 0
    %p119 = por %p117, %p118
    %p120 = scmp.ne.s32.totalorder %s106, %s107
    %p121 = scmp.eq.s32.totalorder %s15, 1
    %p122 = por %p120, %p121
    %p124 = scmp.ne.s32.totalorder %s107, %s123
    %p125 = scmp.eq.s32.totalorder %s15, 0
    %p126 = por %p124, %p125
    %p127 = scmp.le.s32.totalorder 1, %s9
    %p128 = scmp.lt.s32.totalorder %s9, 3
    %p129 = pnand %p127, %p128
    %p130 = pneg %p129
    // Predicated region
    $region9: #{main_model_forward.2} parent=5 // pred_check
      _
    $region10: #{main_model_forward.2} parent=5 // pred_check_branch
      %132 = sbr.rel (%p129) target = $region12
    $region11: #{main_model_forward.2} parent=5 // pred_region
      %s133 = ssub.s32 %s9, 1
      // Predicated region
      $region13: #{main_model_forward.2} parent=11 // pred_check
        %p134 = pneg %p70
      $region14: #{main_model_forward.2} parent=11 // pred_check_branch
        %136 = sbr.rel (%p134) target = $region16
      $region15: #{main_model_forward.2} parent=11 // pred_region
        _
      $region16: #{main_model_forward.2} parent=11 // pred_fallthru
        _
      // Predicated region
      $region17: #{main_model_forward.2} parent=11 // pred_check
        %p137 = pneg %p91
      $region18: #{main_model_forward.2} parent=11 // pred_check_branch
        %139 = sbr.rel (%p137) target = $region20
      $region19: #{main_model_forward.2} parent=11 // pred_region
        _
      $region20: #{main_model_forward.2} parent=11 // pred_fallthru
        _
    $region12: #{main_model_forward.2} parent=5 // pred_fallthru
      _
    %p140 = scmp.lt.s32.totalorder %s9, 2
    // Predicated region
    $region21: #{main_model_forward.2} parent=5 // pred_check
      %p141 = pneg %p140
    $region22: #{main_model_forward.2} parent=5 // pred_check_branch
      %143 = sbr.rel (%p141) target = $region24
    $region23: #{main_model_forward.2} parent=5 // pred_region
      // Predicated region
      $region25: #{main_model_forward.2} parent=23 // pred_check
        %p144 = pneg %p43
      $region26: #{main_model_forward.2} parent=23 // pred_check_branch
        %146 = sbr.rel (%p144) target = $region28
      $region27: #{main_model_forward.2} parent=23 // pred_region
        %s147 = smul.u32 2, %s17
        %p148 = scmp.lt.s32.totalorder %s16, 1
        %s149 = scalar_select %p148, %s16, 1
        %p150 = scmp.lt.s32.totalorder %s147, 1
        %s151 = scalar_select %p150, %s147, 1
        %s152 = smul.addr %s149, 32
        %s153 = sadd.s32 %s151, %s152
        %s154 = smul.addr %s153, 4
        %s155 = scalar_lea.vmem %s0, %s154
        %s156 = smul.u32 2, %s17
      $region28: #{main_model_forward.2} parent=23 // pred_fallthru
        _
    $region24: #{main_model_forward.2} parent=5 // pred_fallthru
      _
    %p157 = scmp.le.s32.totalorder 1, %s9
    %p158 = scmp.lt.s32.totalorder %s9, 3
    %p159 = pnand %p157, %p158
    %p160 = pneg %p159
    // Predicated region
    $region29: #{main_model_forward.2} parent=5 // pred_check
      _
    $region30: #{main_model_forward.2} parent=5 // pred_check_branch
      %162 = sbr.rel (%p159) target = $region32
    $region31: #{main_model_forward.2} parent=5 // pred_region
      %s163 = ssub.s32 %s9, 1
      %s164 = smul.u32 2, %s19
      %p165 = scmp.lt.s32.totalorder %s18, 1
      %s166 = scalar_select %p165, %s18, 1
      %p167 = scmp.lt.s32.totalorder %s164, 1
      %s168 = scalar_select %p167, %s164, 1
      %s169 = smul.addr %s166, 32
      %s170 = sadd.s32 %s168, %s169
      %s171 = smul.addr %s170, 4
      %s172 = scalar_lea.vmem %s0, %s171
      %p173 = pneg %p49
      %p174 = pneg %p46
      %p175 = pneg %p70
      %p176 = pneg %p67
      %p177 = pneg %p91
      %p178 = pneg %p88
      %p179 = pneg %p119
      %p180 = pneg %p116
      %s181 = smul.u32 2, %s19
      %p182 = scmp.lt.s32.totalorder %s18, 1
      %s183 = scalar_select %p182, %s18, 1
      %p184 = scmp.lt.s32.totalorder %s181, 1
      %s185 = scalar_select %p184, %s181, 1
      %s186 = smul.addr %s183, 4
      %s187 = sadd.s32 %s185, %s186
      %s188 = smul.addr %s187, 4
      %s189 = scalar_lea.vmem %s3, %s188
      %s190 = smul.u32 2, %s19
      %p191 = scmp.lt.s32.totalorder %s18, 1
      %s192 = scalar_select %p191, %s18, 1
      %p193 = scmp.lt.s32.totalorder %s190, 1
      %s194 = scalar_select %p193, %s190, 1
      %s195 = smul.addr %s192, 32
      %s196 = sadd.s32 %s194, %s195
      %s197 = smul.addr %s196, 4
      %s198 = scalar_lea.vmem %s0, %s197
      %s199 = smul.u32 2, %s19
      %s200 = smul.u32 2, %s19
      %p201 = scmp.lt.s32.totalorder %s18, 1
      %s202 = scalar_select %p201, %s18, 1
      %p203 = scmp.lt.s32.totalorder %s200, 1
      %s204 = scalar_select %p203, %s200, 1
      %s205 = smul.addr %s202, 4
      %s206 = sadd.s32 %s204, %s205
      %s207 = smul.addr %s206, 4
      %s208 = scalar_lea.vmem %s3, %s207
      %s209 = smul.u32 2, %s19
      %v211 = vld [vmem:[%s1] sm:$0xf]
      %v212 = vld [vmem:[%s1 + $0x4] sm:$0xf]
      %v213 = vld [vmem:[%s1 + $0x8] sm:$0xf]
      %v214 = vld [vmem:[%s1 + $0xc] sm:$0xf]
      %v215 = vld [vmem:[%s1 + $0x10] sm:$0xf]
      %v216 = vld [vmem:[%s1 + $0x14] sm:$0xf]
      %v217 = vld [vmem:[%s1 + $0x18] sm:$0xf]
      %v218 = vld [vmem:[%s1 + $0x1c] sm:$0xf]
      %v219 = vld [vmem:[%s198] sm:$0xff]
      %v220 = vld [vmem:[%s198 + $0x8] sm:$0xff]
      %v221 = vld [vmem:[%s198 + $0x10] sm:$0xff]
      %v222 = vld [vmem:[%s198 + $0x18] sm:$0xff]
      %v223 = vld [vmem:[%s198 + $0x20] sm:$0xff]
      %v224 = vld [vmem:[%s198 + $0x28] sm:$0xff]
      %v225 = vld [vmem:[%s198 + $0x30] sm:$0xff]
      %v226 = vld [vmem:[%s198 + $0x38] sm:$0xff]
      %v227 = vld [vmem:[%s198 + $0x40] sm:$0xff]
      %v228 = vld [vmem:[%s198 + $0x48] sm:$0xff]
      %v229 = vld [vmem:[%s198 + $0x50] sm:$0xff]
      %v230 = vld [vmem:[%s198 + $0x58] sm:$0xff]
      %v231 = vld [vmem:[%s198 + $0x60] sm:$0xff]
      %v232 = vld [vmem:[%s198 + $0x68] sm:$0xff]
      %v233 = vld [vmem:[%s198 + $0x70] sm:$0xff]
      %v234 = vld [vmem:[%s198 + $0x78] sm:$0xff]
      %v243 = vunpack.c.l.b16 %v211
      %v244 = vunpack.c.l.b16 %v212
      %v245 = vunpack.c.l.b16 %v213
      %v246 = vunpack.c.l.b16 %v214
      %v247 = vunpack.c.l.b16 %v215
      %v248 = vunpack.c.l.b16 %v216
      %v249 = vunpack.c.l.b16 %v217
      %v250 = vunpack.c.l.b16 %v218
      %v251 = vpack.c.b16 %v244, %v243
      %v252 = vpack.c.b16 %v246, %v245
      %v253 = vpack.c.b16 %v248, %v247
      %v254 = vpack.c.b16 %v250, %v249
      %v275 = vunpack.c.l.b16 %v219
      %v276 = vunpack.c.h.b16 %v219
      %v277 = vunpack.c.l.b16 %v220
      %v278 = vunpack.c.h.b16 %v220
      %v279 = vunpack.c.l.b16 %v221
      %v280 = vunpack.c.h.b16 %v221
      %v281 = vunpack.c.l.b16 %v222
      %v282 = vunpack.c.h.b16 %v222
      %v283 = vunpack.c.l.b16 %v223
      %v284 = vunpack.c.h.b16 %v223
      %v285 = vunpack.c.l.b16 %v224
      %v286 = vunpack.c.h.b16 %v224
      %v287 = vunpack.c.l.b16 %v225
      %v288 = vunpack.c.h.b16 %v225
      %v289 = vunpack.c.l.b16 %v226
      %v290 = vunpack.c.h.b16 %v226
      %v291 = vunpack.c.l.b16 %v227
      %v292 = vunpack.c.h.b16 %v227
      %v293 = vunpack.c.l.b16 %v228
      %v294 = vunpack.c.h.b16 %v228
      %v295 = vunpack.c.l.b16 %v229
      %v296 = vunpack.c.h.b16 %v229
      %v297 = vunpack.c.l.b16 %v230
      %v298 = vunpack.c.h.b16 %v230
      %v299 = vunpack.c.l.b16 %v231
      %v300 = vunpack.c.h.b16 %v231
      %v301 = vunpack.c.l.b16 %v232
      %v302 = vunpack.c.h.b16 %v232
      %v303 = vunpack.c.l.b16 %v233
      %v304 = vunpack.c.h.b16 %v233
      %v305 = vunpack.c.l.b16 %v234
      %v306 = vunpack.c.h.b16 %v234
      %v307 = vpack.c.b16 %v277, %v275
      %v308 = vpack.c.b16 %v278, %v276
      %v309 = vpack.c.b16 %v281, %v279
      %v310 = vpack.c.b16 %v282, %v280
      %v311 = vpack.c.b16 %v285, %v283
      %v312 = vpack.c.b16 %v286, %v284
      %v313 = vpack.c.b16 %v289, %v287
      %v314 = vpack.c.b16 %v290, %v288
      %v315 = vpack.c.b16 %v293, %v291
      %v316 = vpack.c.b16 %v294, %v292
      %v317 = vpack.c.b16 %v297, %v295
      %v318 = vpack.c.b16 %v298, %v296
      %v319 = vpack.c.b16 %v301, %v299
      %v320 = vpack.c.b16 %v302, %v300
      %v321 = vpack.c.b16 %v305, %v303
      %v322 = vpack.c.b16 %v306, %v304
      %339 = vmatprep.subr.bf16.mxu0 %v322
      %340 = vmatpush1.bf16.msra.mxu0 %v321
      %341 = vmatprep.subr.bf16.mxu0 %v320
      %342 = vmatpush1.bf16.msra.mxu0 %v319
      %343 = vmatprep.subr.bf16.mxu0 %v318
      %344 = vmatpush1.bf16.msra.mxu0 %v317
      %345 = vmatprep.subr.bf16.mxu0 %v316
      %346 = vmatpush1.bf16.msra.mxu0 %v315
      %347 = vmatprep.subr.bf16.mxu0 %v314
      %348 = vmatpush1.bf16.msra.mxu0 %v313
      %349 = vmatprep.subr.bf16.mxu0 %v312
      %350 = vmatpush1.bf16.msra.mxu0 %v311
      %351 = vmatprep.subr.bf16.mxu0 %v310
      %352 = vmatpush1.bf16.msra.mxu0 %v309
      %353 = vmatprep.subr.bf16.mxu0 %v308
      %354 = vmatpush1.bf16.msra.mxu0 %v307
      %355 = vmatprep.subr.bf16.mxu0 0
      %356 = vmatpush2.bf16.msra.mxu0 0
      %357 = vmatprep.subr.bf16.mxu0 0
      %358 = vmatpush2.bf16.msra.mxu0 0
      %359 = vmatprep.subr.bf16.mxu0 0
      %360 = vmatpush2.bf16.msra.mxu0 0
      %361 = vmatprep.subr.bf16.mxu0 0
      %362 = vmatpush2.bf16.msra.mxu0 0
      %363 = vmatprep.subr.bf16.mxu0 0
      %364 = vmatpush2.bf16.msra.mxu0 0
      %365 = vmatprep.subr.bf16.mxu0 0
      %366 = vmatpush2.bf16.msra.mxu0 0
      %367 = vmatprep.subr.bf16.mxu0 0
      %368 = vmatpush2.bf16.msra.mxu0 0
      %369 = vmatprep.subr.bf16.mxu0 0
      %370 = vmatpush2.bf16.msra.mxu0 0
      %371 = vmatprep.mubr.bf16.mxu0 0
      %372 = vmatmul.mubr.bf16.gmra.mxu0 %v251
      %v373 = vpop.f32.mrf.mxu0
      %v374 = vadd.f32 0.0, %v373
      %v375 = vpop.f32.mrf.mxu0
      %v376 = vadd.f32 0.0, %v375
      %v377 = vpop.f32.mrf.mxu0
      %v378 = vadd.f32 0.0, %v377
      %v379 = vpop.f32.mrf.mxu0
      %v380 = vadd.f32 0.0, %v379
      %381 = vmatprep.mubr.bf16.mxu0 0
      %382 = vmatmul.mubr.bf16.gmra.mxu0 %v252
      %v383 = vpop.f32.mrf.mxu0
      %v384 = vadd.f32 0.0, %v383
      %v385 = vpop.f32.mrf.mxu0
      %v386 = vadd.f32 0.0, %v385
      %v387 = vpop.f32.mrf.mxu0
      %v388 = vadd.f32 0.0, %v387
      %v389 = vpop.f32.mrf.mxu0
      %v390 = vadd.f32 0.0, %v389
      %391 = vmatprep.mubr.bf16.mxu0 0
      %392 = vmatmul.mubr.bf16.gmra.mxu0 %v253
      %v393 = vpop.f32.mrf.mxu0
      %v394 = vadd.f32 0.0, %v393
      %v395 = vpop.f32.mrf.mxu0
      %v396 = vadd.f32 0.0, %v395
      %v397 = vpop.f32.mrf.mxu0
      %v398 = vadd.f32 0.0, %v397
      %v399 = vpop.f32.mrf.mxu0
      %v400 = vadd.f32 0.0, %v399
      %401 = vmatprep.mubr.bf16.mxu0 0
      %402 = vmatmul.mubr.bf16.gmra.mxu0 %v254
      %v403 = vpop.f32.mrf.mxu0
      %v404 = vadd.f32 0.0, %v403
      %v405 = vpop.f32.mrf.mxu0
      %v406 = vadd.f32 0.0, %v405
      %v407 = vpop.f32.mrf.mxu0
      %v408 = vadd.f32 0.0, %v407
      %v409 = vpop.f32.mrf.mxu0
      %v410 = vadd.f32 0.0, %v409
      %411 = vdwg.mxu0
      %v412 = vmax.f32 %v374, %v384
      %v413 = vmax.f32 %v376, %v386
      %v414 = vmax.f32 %v378, %v388
      %v415 = vmax.f32 %v380, %v390
      %v416 = vmax.f32 %v394, %v404
      %v417 = vmax.f32 %v396, %v406
      %v418 = vmax.f32 %v398, %v408
      %v419 = vmax.f32 %v400, %v410
      %v420 = vmax.f32 %v412, %v416
      %v421 = vmax.f32 %v413, %v417
      %v422 = vmax.f32 %v414, %v418
      %v423 = vmax.f32 %v415, %v419
      %v424 = vld [vmem:[%s2] sm:$0xff]
      %v425 = vld [vmem:[%s2 + $0x8] sm:$0xff]
      %427 = vset.pattern.permute.xlu0 0
      %428 = vperm.xlu0 %427, %v424
      %v429 = vpop.permute.xlu0 %428
      %432 = vset.pattern.permute.xlu0 0
      %433 = vperm.xlu0 %432, %v425
      %v434 = vpop.permute.xlu0 %433
      %v436 = vadd.f32 %v420, %v429
      %v437 = vadd.f32 %v421, %v429
      %v438 = vadd.f32 %v422, %v434
      %v439 = vadd.f32 %v423, %v434
      %v440 = vmax.f32 %v436, 0.0
      %v441 = vmax.f32 %v437, 0.0
      %v442 = vmax.f32 %v438, 0.0
      %v443 = vmax.f32 %v439, 0.0
      %v444 = vpack.c.bf16 %v442, %v440
      %v445 = vpack.c.bf16 %v443, %v441
      %v448 = vunpack.c.l.b16 %v444
      %v449 = vunpack.c.l.b16 %v445
      %v450 = vunpack.c.h.b16 %v444
      %v451 = vunpack.c.h.b16 %v445
      %v452 = vpack.c.b16 %v449, %v448
      %v453 = vpack.c.b16 %v451, %v450
      %456 = vst [vmem:[%s208] sm:$0xff] %v452
      %457 = vst [vmem:[%s208 + $0x8] sm:$0xff] %v453
      %s458 = smul.u32 2, %s19
      %p459 = scmp.lt.s32.totalorder %s18, 1
      %s460 = scalar_select %p459, %s18, 1
      %p461 = scmp.lt.s32.totalorder %s458, 1
      %s462 = scalar_select %p461, %s458, 1
      %s463 = smul.addr %s460, 4
      %s464 = sadd.s32 %s462, %s463
      %s465 = smul.addr %s464, 4
      %s466 = scalar_lea.vmem %s3, %s465
      // Predicated region
      $region33: #{main_model_forward.2} parent=31 // pred_check
        %p467 = pneg %p116
      $region34: #{main_model_forward.2} parent=31 // pred_check_branch
        %469 = sbr.rel (%p467) target = $region36
      $region35: #{main_model_forward.2} parent=31 // pred_region
        %s470 = smul.u32 2, %s19
      $region36: #{main_model_forward.2} parent=31 // pred_fallthru
        _
    $region32: #{main_model_forward.2} parent=5 // pred_fallthru
      _
    %p471 = scmp.le.s32.totalorder 2, %s9
    // Predicated region
    $region37: #{main_model_forward.2} parent=5 // pred_check
      %p472 = pneg %p471
    $region38: #{main_model_forward.2} parent=5 // pred_check_branch
      %474 = sbr.rel (%p472) target = $region40
    $region39: #{main_model_forward.2} parent=5 // pred_region
      %s475 = ssub.s32 %s9, 2
      // Predicated region
      $region41: #{main_model_forward.2} parent=39 // pred_check
        %p476 = pneg %p122
      $region42: #{main_model_forward.2} parent=39 // pred_check_branch
        %478 = sbr.rel (%p476) target = $region44
      $region43: #{main_model_forward.2} parent=39 // pred_region
        %s479 = smul.u32 2, %s21
        %p480 = scmp.lt.s32.totalorder %s20, 1
        %s481 = scalar_select %p480, %s20, 1
        %p482 = scmp.lt.s32.totalorder %s479, 1
        %s483 = scalar_select %p482, %s479, 1
        %s484 = smul.addr %s481, 4
        %s485 = sadd.s32 %s483, %s484
        %s486 = smul.addr %s485, 4
        %s487 = scalar_lea.vmem %s3, %s486
      $region44: #{main_model_forward.2} parent=39 // pred_fallthru
        _
    $region40: #{main_model_forward.2} parent=5 // pred_fallthru
      _
  $region6: #{main_model_forward.2} parent=0 // loop_footer
    %s13 = sadd.s32 1, %s9
  $region7: #{main_model_forward.2} parent=0 // loop_footer_branch
    %8 = sbr.rel target = $region3
  $region8: #{main_model_forward.2} parent=0 // loop_exit
    _

// kernel: main_model_forward.3
$region0: #{main_model_forward.3}
  #allocation0 [shape = 'u32[]', space=smem, size = 0x4, offset = 0x4, fixed_abs, tag = 'smem constant byte address 0x4 - core index']
  #allocation1 [shape = 'u32[144,128]{1,0:T(1,128)}', space=vmem, size = 0x12000, scoped, tag = 'internal scratch']
  #allocation2 [shape = 'f32[2,16]{1,0:T(2,128)}', space=vmem, size = 0x400, scoped, tag = 'scratch operand']
  %s0 = inlined_call_operand.vmem [shape: bf16[2,4096], index: 0, kind: input, shape index: {}]
  %s1 = inlined_call_operand.vmem [shape: bf16[16,4096], index: 1, kind: input, shape index: {}]
  %s2 = inlined_call_operand.vmem [shape: f32[2,2,16], index: 2, kind: output, shape index: {}]
  %s3 = sld [smem:[#allocation0]]
  $region72: #{main_model_forward.3} parent=0
    _
  %s5 = ssub.s32 1, %s3
  %s6 = scalar_select 0, %s5, %s3
  $region1: #{main_model_forward.3} parent=0
    #allocation3 [shape = 'u8[131072]{0}', space=vmem, size = 0x20000, scoped, tag = 'input window, operand 1']
    loop: start=0, step=1, limit=4
    $region2: #{main_model_forward.3} parent=1 // loop_pre_header
      _
    $region3: #{main_model_forward.3} parent=1 // loop_header
      %s8 = sphi 0, %s12
      %p9 = scmp.ge.s32.totalorder %s8, 4
      %s15 = sphi 0, %s27
      %s16 = sphi 0, %s23
      %s17 = sphi 0, %s15
      %s18 = sphi 0, %s16
      %s19 = sphi 0, %s17
      %s20 = sphi 0, %s18
      %s32 = sphi 0, %s34
      %s35 = sphi 0, %s32
      %s36 = sphi 0, %s35
      %s52 = sphi 0, %s36
      %s60 = sphi 0, %s62
      %s63 = sphi 0, %s60
      %s64 = sphi 0, %s63
      %s80 = sphi 0, %s64
      %s86 = sphi 0, %s88
      %s89 = sphi 0, %s86
      %s90 = sphi 0, %s89
      %s106 = sphi 0, %s90
    $region4: #{main_model_forward.3} parent=1 // loop_header_branch
      %11 = sbr.rel (%p9) target = $region8
    $region5: #{main_model_forward.3} parent=1 // loop_body
      %s13 = ssub.s32 %s8, 1
      %s14 = ssub.s32 %s8, 2
      %s21 = sadd.s32 1, %s16
      %p22 = scmp.ge.s32.totalorder %s21, 1
      %s23 = scalar_select %p22, 0, %s21
      %s24 = sadd.s32 1, %s15
      %s25 = scalar_select %p22, %s24, %s15
      %p26 = scmp.ge.s32.totalorder %s25, 2
      %s27 = scalar_select %p26, 0, %s25
      %s28 = sadd.s32 %s15, %s16
      %s29 = sadd.s32 %s27, %s23
      %s30 = ssub.s32 %s28, %s29
      %p31 = scmp.eq.s32.totalorder %s30, 0
      %s33 = sadd.s32 %s32, 1
      %s34 = scalar_select %p31, %s32, %s33
      %p37 = pneg %p31
      %p38 = scmp.eq.s32.totalorder %s8, 1
      %p39 = por %p37, %p38
      %p40 = scmp.ne.s32.totalorder %s32, %s35
      %p41 = scmp.eq.s32.totalorder %s8, 0
      %p42 = por %p40, %p41
      %p43 = scmp.ne.s32.totalorder %s32, %s35
      %p44 = scmp.eq.s32.totalorder %s13, 1
      %p45 = por %p43, %p44
      %p46 = scmp.ne.s32.totalorder %s35, %s36
      %p47 = scmp.eq.s32.totalorder %s13, 0
      %p48 = por %p46, %p47
      %p49 = scmp.ne.s32.totalorder %s35, %s36
      %p50 = scmp.eq.s32.totalorder %s14, 1
      %p51 = por %p49, %p50
      %p53 = scmp.ne.s32.totalorder %s36, %s52
      %p54 = scmp.eq.s32.totalorder %s14, 0
      %p55 = por %p53, %p54
      %s56 = sadd.s32 %s15, %s16
      %s57 = sadd.s32 %s27, %s23
      %s58 = ssub.s32 %s56, %s57
      %p59 = scmp.eq.s32.totalorder %s58, 0
      %s61 = sadd.s32 %s60, 1
      %s62 = scalar_select %p59, %s60, %s61
      %p65 = pneg %p59
      %p66 = scmp.eq.s32.totalorder %s8, 1
      %p67 = por %p65, %p66
      %p68 = scmp.ne.s32.totalorder %s60, %s63
      %p69 = scmp.eq.s32.totalorder %s8, 0
      %p70 = por %p68, %p69
      %p71 = scmp.ne.s32.totalorder %s60, %s63
      %p72 = scmp.eq.s32.totalorder %s13, 1
      %p73 = por %p71, %p72
      %p74 = scmp.ne.s32.totalorder %s63, %s64
      %p75 = scmp.eq.s32.totalorder %s13, 0
      %p76 = por %p74, %p75
      %p77 = scmp.ne.s32.totalorder %s63, %s64
      %p78 = scmp.eq.s32.totalorder %s14, 1
      %p79 = por %p77, %p78
      %p81 = scmp.ne.s32.totalorder %s64, %s80
      %p82 = scmp.eq.s32.totalorder %s14, 0
      %p83 = por %p81, %p82
      %s84 = ssub.s32 %s15, %s27
      %p85 = scmp.eq.s32.totalorder %s84, 0
      %s87 = sadd.s32 %s86, 1
      %s88 = scalar_select %p85, %s86, %s87
      %p91 = pneg %p85
      %p92 = scmp.eq.s32.totalorder %s8, 1
      %p93 = por %p91, %p92
      %p94 = scmp.ne.s32.totalorder %s86, %s89
      %p95 = scmp.eq.s32.totalorder %s8, 0
      %p96 = por %p94, %p95
      %p97 = scmp.ne.s32.totalorder %s86, %s89
      %p98 = scmp.eq.s32.totalorder %s13, 1
      %p99 = por %p97, %p98
      %p100 = scmp.ne.s32.totalorder %s89, %s90
      %p101 = scmp.eq.s32.totalorder %s13, 0
      %p102 = por %p100, %p101
      %p103 = scmp.ne.s32.totalorder %s89, %s90
      %p104 = scmp.eq.s32.totalorder %s14, 1
      %p105 = por %p103, %p104
      %p107 = scmp.ne.s32.totalorder %s90, %s106
      %p108 = scmp.eq.s32.totalorder %s14, 0
      %p109 = por %p107, %p108
      %p110 = scmp.le.s32.totalorder 1, %s8
      %p111 = scmp.lt.s32.totalorder %s8, 3
      %p112 = pnand %p110, %p111
      %p113 = pneg %p112
      // Predicated region
      $region9: #{main_model_forward.3} parent=5 // pred_check
        _
      $region10: #{main_model_forward.3} parent=5 // pred_check_branch
        %115 = sbr.rel (%p112) target = $region12
      $region11: #{main_model_forward.3} parent=5 // pred_region
        %s116 = ssub.s32 %s8, 1
      $region12: #{main_model_forward.3} parent=5 // pred_fallthru
        _
      %p117 = scmp.lt.s32.totalorder %s8, 2
      // Predicated region
      $region13: #{main_model_forward.3} parent=5 // pred_check
        %p118 = pneg %p117
      $region14: #{main_model_forward.3} parent=5 // pred_check_branch
        %120 = sbr.rel (%p118) target = $region16
      $region15: #{main_model_forward.3} parent=5 // pred_region
        // Predicated region
        $region17: #{main_model_forward.3} parent=15 // pred_check
          %p121 = pneg %p42
        $region18: #{main_model_forward.3} parent=15 // pred_check_branch
          %123 = sbr.rel (%p121) target = $region20
        $region19: #{main_model_forward.3} parent=15 // pred_region
          %s124 = sadd.s32 %s15, %s16
          %s125 = smul.u32 16, %s124
          %p126 = scmp.lt.s32.totalorder %s125, 31
          %s127 = scalar_select %p126, %s125, 31
          %s128 = scalar_lea.vmem %s0, %s127
          %s129 = sadd.s32 %s15, %s16
          %s130 = smul.u32 16, %s129
        $region20: #{main_model_forward.3} parent=15 // pred_fallthru
          _
        // Predicated region
        $region21: #{main_model_forward.3} parent=15 // pred_check
          %p131 = pneg %p70
        $region22: #{main_model_forward.3} parent=15 // pred_check_branch
          %133 = sbr.rel (%p131) target = $region24
        $region23: #{main_model_forward.3} parent=15 // pred_region
          %s134 = sand.u32 %s60, 1
          %s135 = sand.u32 %s60, 1
          %s136 = smul.addr %s135, 128
          %s137 = scalar_lea.vmem [#allocation3], %s136
          %s138 = sadd.s32 %s15, %s16
          %s139 = smul.u32 16, %s138
          %s140 = smul.addr %s139, 4
          %s141 = scalar_lea.vmem %s1, %s140
          // Predicated region
          $region25: #{main_model_forward.3} parent=23 // pred_check
            _
          $region26: #{main_model_forward.3} parent=23 // pred_check_branch
            %143 = sbr.rel (0) target = $region28
          $region27: #{main_model_forward.3} parent=23 // pred_region
            // Predicated region
            $region29: #{main_model_forward.3} parent=27 // pred_check
              _
            $region30: #{main_model_forward.3} parent=27 // pred_check_branch
              %145 = sbr.rel (0) target = $region32
            $region31: #{main_model_forward.3} parent=27 // pred_region
              loop: start=0, step=1, limit=1
              $region33: #{main_model_forward.3} parent=31 // loop_pre_header
                _
              $region34: #{main_model_forward.3} parent=31 // loop_header
                %s147 = sphi 0, %s151
                %p148 = scmp.ge.s32.totalorder %s147, 1
                %s152 = sphi %s141, %s141
                %s153 = sphi %s137, %s137
              $region35: #{main_model_forward.3} parent=31 // loop_header_branch
                %150 = sbr.rel (%p148) target = $region39
              $region36: #{main_model_forward.3} parent=31 // loop_body
                %v154 = vld [vmem:[%s152] sm:$0xff]
                %155 = vst [vmem:[%s153] sm:$0xff] %v154
                %v156 = vld [vmem:[%s152 + $0x8] sm:$0xff]
                %157 = vst [vmem:[%s153 + $0x8] sm:$0xff] %v156
                %v158 = vld [vmem:[%s152 + $0x10] sm:$0xff]
                %159 = vst [vmem:[%s153 + $0x10] sm:$0xff] %v158
                %v160 = vld [vmem:[%s152 + $0x18] sm:$0xff]
                %161 = vst [vmem:[%s153 + $0x18] sm:$0xff] %v160
                %v162 = vld [vmem:[%s152 + $0x20] sm:$0xff]
                %163 = vst [vmem:[%s153 + $0x20] sm:$0xff] %v162
                %v164 = vld [vmem:[%s152 + $0x28] sm:$0xff]
                %165 = vst [vmem:[%s153 + $0x28] sm:$0xff] %v164
                %v166 = vld [vmem:[%s152 + $0x30] sm:$0xff]
                %167 = vst [vmem:[%s153 + $0x30] sm:$0xff] %v166
                %v168 = vld [vmem:[%s152 + $0x38] sm:$0xff]
                %169 = vst [vmem:[%s153 + $0x38] sm:$0xff] %v168
                %v170 = vld [vmem:[%s152 + $0x80] sm:$0xff]
                %171 = vst [vmem:[%s153 + $0x40] sm:$0xff] %v170
                %v172 = vld [vmem:[%s152 + $0x88] sm:$0xff]
                %173 = vst [vmem:[%s153 + $0x48] sm:$0xff] %v172
                %v174 = vld [vmem:[%s152 + $0x90] sm:$0xff]
                %175 = vst [vmem:[%s153 + $0x50] sm:$0xff] %v174
                %v176 = vld [vmem:[%s152 + $0x98] sm:$0xff]
                %177 = vst [vmem:[%s153 + $0x58] sm:$0xff] %v176
                %v178 = vld [vmem:[%s152 + $0xa0] sm:$0xff]
                %179 = vst [vmem:[%s153 + $0x60] sm:$0xff] %v178
                %v180 = vld [vmem:[%s152 + $0xa8] sm:$0xff]
                %181 = vst [vmem:[%s153 + $0x68] sm:$0xff] %v180
                %v182 = vld [vmem:[%s152 + $0xb0] sm:$0xff]
                %183 = vst [vmem:[%s153 + $0x70] sm:$0xff] %v182
                %v184 = vld [vmem:[%s152 + $0xb8] sm:$0xff]
                %185 = vst [vmem:[%s153 + $0x78] sm:$0xff] %v184
              $region37: #{main_model_forward.3} parent=31 // loop_footer
                %s151 = sadd.s32 1, %s147
              $region38: #{main_model_forward.3} parent=31 // loop_footer_branch
                %146 = sbr.rel target = $region34
              $region39: #{main_model_forward.3} parent=31 // loop_exit
                _
            $region32: #{main_model_forward.3} parent=27 // pred_fallthru
              _
            // Predicated region
            $region40: #{main_model_forward.3} parent=27 // pred_check
              _
            $region41: #{main_model_forward.3} parent=27 // pred_check_branch
              %187 = sbr.rel target = $region43
            $region42: #{main_model_forward.3} parent=27 // pred_region
              _
            $region43: #{main_model_forward.3} parent=27 // pred_fallthru
              _
          $region28: #{main_model_forward.3} parent=23 // pred_fallthru
            _
          %188 = vnop
        $region24: #{main_model_forward.3} parent=15 // pred_fallthru
          _
      $region16: #{main_model_forward.3} parent=5 // pred_fallthru
        _
      %p189 = scmp.le.s32.totalorder 1, %s8
      %p190 = scmp.lt.s32.totalorder %s8, 3
      %p191 = pnand %p189, %p190
      %p192 = pneg %p191
      // Predicated region
      $region44: #{main_model_forward.3} parent=5 // pred_check
        _
      $region45: #{main_model_forward.3} parent=5 // pred_check_branch
        %194 = sbr.rel (%p191) target = $region47
      $region46: #{main_model_forward.3} parent=5 // pred_region
        %s195 = ssub.s32 %s8, 1
        %s196 = sand.u32 %s63, 1
        %s197 = sand.u32 %s63, 1
        %s198 = smul.addr %s197, 128
        %s199 = scalar_lea.vmem [#allocation3], %s198
        // Predicated region
        $region48: #{main_model_forward.3} parent=46 // pred_check
          %p200 = pneg %p76
        $region49: #{main_model_forward.3} parent=46 // pred_check_branch
          %202 = sbr.rel (%p200) target = $region51
        $region50: #{main_model_forward.3} parent=46 // pred_region
          _
        $region51: #{main_model_forward.3} parent=46 // pred_fallthru
          _
        %s203 = sadd.s32 %s17, %s18
        %s204 = smul.u32 16, %s203
        %p205 = scmp.lt.s32.totalorder %s204, 31
        %s206 = scalar_select %p205, %s204, 31
        %s207 = scalar_lea.vmem %s0, %s206
        %p208 = pneg %p48
        %p209 = pneg %p45
        %s210 = sand.u32 %s63, 1
        %s211 = sand.u32 %s63, 1
        %s212 = smul.addr %s211, 128
        %s213 = scalar_lea.vmem [#allocation3], %s212
        %p214 = pneg %p76
        %p215 = pneg %p73
        %p216 = pneg %p102
        %p217 = pneg %p99
        %p218 = scmp.lt.s32.totalorder %s17, 1
        %s219 = scalar_select %p218, %s17, 1
        %s220 = smul.addr %s219, 2
        %s221 = scalar_lea.vmem %s2, %s220
        %s222 = sadd.s32 %s17, %s18
        %s223 = smul.u32 16, %s222
        %p224 = scmp.lt.s32.totalorder %s223, 31
        %s225 = scalar_select %p224, %s223, 31
        %s226 = scalar_lea.vmem %s0, %s225
        %s227 = sadd.s32 %s17, %s18
        %s228 = smul.u32 16, %s227
        %s229 = sadd.s32 %s17, %s18
        %s230 = smul.u32 16, %s229
        %p231 = scmp.lt.s32.totalorder %s17, 1
        %s232 = scalar_select %p231, %s17, 1
        %s233 = smul.addr %s232, 2
        %s234 = scalar_lea.vmem %s2, %s233
        %p236 = scmp.eq.s32.totalorder %s18, 0
        // Predicated region
        $region52: #{main_model_forward.3} parent=46 // pred_check
          %p237 = pneg %p236
        $region53: #{main_model_forward.3} parent=46 // pred_check_branch
          %239 = sbr.rel (%p237) target = $region55
        $region54: #{main_model_forward.3} parent=46 // pred_region
          %vm240 = vcmask 123904
          %241 = vst.msk [vmem:[#allocation2] sm:$0x3] %vm240, 0.0
        $region55: #{main_model_forward.3} parent=46 // pred_fallthru
          _
        %v242 = vld [vmem:[#allocation2] sm:$0x3]
        %v243 = vld [vmem:[%s226] sm:$0xff]
        %v244 = vld [vmem:[%s226 + $0x8] sm:$0xff]
        %v245 = vld [vmem:[%s199] sm:$0xff]
        %v246 = vld [vmem:[%s199 + $0x8] sm:$0xff]
        %v247 = vld [vmem:[%s199 + $0x10] sm:$0xff]
        %v248 = vld [vmem:[%s199 + $0x18] sm:$0xff]
        %v249 = vld [vmem:[%s199 + $0x20] sm:$0xff]
        %v250 = vld [vmem:[%s199 + $0x28] sm:$0xff]
        %v251 = vld [vmem:[%s199 + $0x30] sm:$0xff]
        %v252 = vld [vmem:[%s199 + $0x38] sm:$0xff]
        %v253 = vld [vmem:[%s199 + $0x40] sm:$0xff]
        %v254 = vld [vmem:[%s199 + $0x48] sm:$0xff]
        %v255 = vld [vmem:[%s199 + $0x50] sm:$0xff]
        %v256 = vld [vmem:[%s199 + $0x58] sm:$0xff]
        %v257 = vld [vmem:[%s199 + $0x60] sm:$0xff]
        %v258 = vld [vmem:[%s199 + $0x68] sm:$0xff]
        %v259 = vld [vmem:[%s199 + $0x70] sm:$0xff]
        %v260 = vld [vmem:[%s199 + $0x78] sm:$0xff]
        %v263 = vcombine.high %v243, %v243
        %v265 = vunpack.c.l.s4 1966171168
        %v266 = vunpack.c.0.s8 %v265
        %v267 = vlaneseq
        %v268 = vshrl.u32 %v267, 7
        %v269 = vsub.s32 %v266, %v268
        %v270 = vrot.slane %v243, %v269
        %v272 = vunpack.c.l.s4 1966171168
        %v273 = vunpack.c.0.s8 %v272
        %v274 = vlaneseq
        %v275 = vshrl.u32 %v274, 7
        %v276 = vsub.s32 %v273, %v275
        %v277 = vrot.slane %v263, %v276
        %v278 = vcombine.high %v270, %v270
        %v279 = vcombine.high %v277, %v277
        %v281 = vunpack.c.l.s4 1966171168
        %v282 = vunpack.c.0.s8 %v281
        %v283 = vlaneseq
        %v284 = vshrl.u32 %v283, 7
        %v285 = vsub.s32 %v282, %v284
        %v286 = vrot.slane %v270, %v285
        %v288 = vunpack.c.l.s4 1966171168
        %v289 = vunpack.c.0.s8 %v288
        %v290 = vlaneseq
        %v291 = vshrl.u32 %v290, 7
        %v292 = vsub.s32 %v289, %v291
        %v293 = vrot.slane %v277, %v292
        %v295 = vunpack.c.l.s4 1966171168
        %v296 = vunpack.c.0.s8 %v295
        %v297 = vlaneseq
        %v298 = vshrl.u32 %v297, 7
        %v299 = vsub.s32 %v296, %v298
        %v300 = vrot.slane %v278, %v299
        %v302 = vunpack.c.l.s4 1966171168
        %v303 = vunpack.c.0.s8 %v302
        %v304 = vlaneseq
        %v305 = vshrl.u32 %v304, 7
        %v306 = vsub.s32 %v303, %v305
        %v307 = vrot.slane %v279, %v306
        %v308 = vcombine.high %v286, %v286
        %v309 = vcombine.high %v293, %v293
        %v310 = vcombine.high %v300, %v300
        %v311 = vcombine.high %v307, %v307
        %v312 = vcombine.high %v244, %v244
        %v314 = vunpack.c.l.s4 1966171168
        %v315 = vunpack.c.0.s8 %v314
        %v316 = vlaneseq
        %v317 = vshrl.u32 %v316, 7
        %v318 = vsub.s32 %v315, %v317
        %v319 = vrot.slane %v244, %v318
        %v321 = vunpack.c.l.s4 1966171168
        %v322 = vunpack.c.0.s8 %v321
        %v323 = vlaneseq
        %v324 = vshrl.u32 %v323, 7
        %v325 = vsub.s32 %v322, %v324
        %v326 = vrot.slane %v312, %v325
        %v327 = vcombine.high %v319, %v319
        %v328 = vcombine.high %v326, %v326
        %v330 = vunpack.c.l.s4 1966171168
        %v331 = vunpack.c.0.s8 %v330
        %v332 = vlaneseq
        %v333 = vshrl.u32 %v332, 7
        %v334 = vsub.s32 %v331, %v333
        %v335 = vrot.slane %v319, %v334
        %v337 = vunpack.c.l.s4 1966171168
        %v338 = vunpack.c.0.s8 %v337
        %v339 = vlaneseq
        %v340 = vshrl.u32 %v339, 7
        %v341 = vsub.s32 %v338, %v340
        %v342 = vrot.slane %v326, %v341
        %v344 = vunpack.c.l.s4 1966171168
        %v345 = vunpack.c.0.s8 %v344
        %v346 = vlaneseq
        %v347 = vshrl.u32 %v346, 7
        %v348 = vsub.s32 %v345, %v347
        %v349 = vrot.slane %v327, %v348
        %v351 = vunpack.c.l.s4 1966171168
        %v352 = vunpack.c.0.s8 %v351
        %v353 = vlaneseq
        %v354 = vshrl.u32 %v353, 7
        %v355 = vsub.s32 %v352, %v354
        %v356 = vrot.slane %v328, %v355
        %v357 = vcombine.high %v335, %v335
        %v358 = vcombine.high %v342, %v342
        %v359 = vcombine.high %v349, %v349
        %v360 = vcombine.high %v356, %v356
        %v393 = vunpack.c.l.b16 %v245
        %v394 = vunpack.c.h.b16 %v245
        %v395 = vunpack.c.l.b16 %v246
        %v396 = vunpack.c.h.b16 %v246
        %v397 = vunpack.c.l.b16 %v247
        %v398 = vunpack.c.h.b16 %v247
        %v399 = vunpack.c.l.b16 %v248
        %v400 = vunpack.c.h.b16 %v248
        %v401 = vunpack.c.l.b16 %v249
        %v402 = vunpack.c.h.b16 %v249
        %v403 = vunpack.c.l.b16 %v250
        %v404 = vunpack.c.h.b16 %v250
        %v405 = vunpack.c.l.b16 %v251
        %v406 = vunpack.c.h.b16 %v251
        %v407 = vunpack.c.l.b16 %v252
        %v408 = vunpack.c.h.b16 %v252
        %v409 = vunpack.c.l.b16 %v253
        %v410 = vunpack.c.h.b16 %v253
        %v411 = vunpack.c.l.b16 %v254
        %v412 = vunpack.c.h.b16 %v254
        %v413 = vunpack.c.l.b16 %v255
        %v414 = vunpack.c.h.b16 %v255
        %v415 = vunpack.c.l.b16 %v256
        %v416 = vunpack.c.h.b16 %v256
        %v417 = vunpack.c.l.b16 %v257
        %v418 = vunpack.c.h.b16 %v257
        %v419 = vunpack.c.l.b16 %v258
        %v420 = vunpack.c.h.b16 %v258
        %v421 = vunpack.c.l.b16 %v259
        %v422 = vunpack.c.h.b16 %v259
        %v423 = vunpack.c.l.b16 %v260
        %v424 = vunpack.c.h.b16 %v260
        %v425 = vpack.c.b16 %v409, %v393
        %v426 = vpack.c.b16 %v410, %v394
        %v427 = vpack.c.b16 %v411, %v395
        %v428 = vpack.c.b16 %v412, %v396
        %v429 = vpack.c.b16 %v413, %v397
        %v430 = vpack.c.b16 %v414, %v398
        %v431 = vpack.c.b16 %v415, %v399
        %v432 = vpack.c.b16 %v416, %v400
        %v433 = vpack.c.b16 %v417, %v401
        %v434 = vpack.c.b16 %v418, %v402
        %v435 = vpack.c.b16 %v419, %v403
        %v436 = vpack.c.b16 %v420, %v404
        %v437 = vpack.c.b16 %v421, %v405
        %v438 = vpack.c.b16 %v422, %v406
        %v439 = vpack.c.b16 %v423, %v407
        %v440 = vpack.c.b16 %v424, %v408
        %457 = vmatprep.subr.bf16.mxu0 0
        %458 = vmatpush1.bf16.xpose.msra.mxu0 0
        %459 = vmatprep.subr.bf16.mxu0 0
        %460 = vmatpush1.bf16.xpose.msra.mxu0 0
        %461 = vmatprep.subr.bf16.mxu0 0
        %462 = vmatpush1.bf16.xpose.msra.mxu0 0
        %463 = vmatprep.subr.bf16.mxu0 0
        %464 = vmatpush1.bf16.xpose.msra.mxu0 0
        %465 = vmatprep.subr.bf16.mxu0 0
        %466 = vmatpush1.bf16.xpose.msra.mxu0 0
        %467 = vmatprep.subr.bf16.mxu0 0
        %468 = vmatpush1.bf16.xpose.msra.mxu0 0
        %469 = vmatprep.subr.bf16.mxu0 0
        %470 = vmatpush1.bf16.xpose.msra.mxu0 0
        %471 = vmatprep.subr.bf16.mxu0 %v426
        %472 = vmatpush1.bf16.xpose.msra.mxu0 %v425
        %473 = vmatprep.subr.bf16.mxu0 0
        %474 = vmatpush2.bf16.xpose.msra.mxu0 0
        %475 = vmatprep.subr.bf16.mxu0 0
        %476 = vmatpush2.bf16.xpose.msra.mxu0 0
        %477 = vmatprep.subr.bf16.mxu0 0
        %478 = vmatpush2.bf16.xpose.msra.mxu0 0
        %479 = vmatprep.subr.bf16.mxu0 0
        %480 = vmatpush2.bf16.xpose.msra.mxu0 0
        %481 = vmatprep.subr.bf16.mxu0 0
        %482 = vmatpush2.bf16.xpose.msra.mxu0 0
        %483 = vmatprep.subr.bf16.mxu0 0
        %484 = vmatpush2.bf16.xpose.msra.mxu0 0
        %485 = vmatprep.subr.bf16.mxu0 0
        %486 = vmatpush2.bf16.xpose.msra.mxu0 0
        %487 = vmatprep.subr.bf16.mxu0 0
        %488 = vmatpush2.bf16.xpose.msra.mxu0 0
        %489 = vmatprep.mubr.bf16.mxu0 %v300
        %490 = vmatmul.mubr.bf16.gmra.mxu0 %v286
        %v491 = vpop.f32.mrf.mxu0
        %v492 = vadd.f32 0.0, %v491
        %v493 = vpop.f32.mrf.mxu0
        %v494 = vpop.f32.mrf.mxu0
        %v495 = vpop.f32.mrf.mxu0
        %496 = vdwg.mxu0
        %497 = vmatprep.subr.bf16.mxu0 0
        %498 = vmatpush1.bf16.xpose.msra.mxu0 0
        %499 = vmatprep.subr.bf16.mxu0 0
        %500 = vmatpush1.bf16.xpose.msra.mxu0 0
        %501 = vmatprep.subr.bf16.mxu0 0
        %502 = vmatpush1.bf16.xpose.msra.mxu0 0
        %503 = vmatprep.subr.bf16.mxu0 0
        %504 = vmatpush1.bf16.xpose.msra.mxu0 0
        %505 = vmatprep.subr.bf16.mxu0 0
        %506 = vmatpush1.bf16.xpose.msra.mxu0 0
        %507 = vmatprep.subr.bf16.mxu0 0
        %508 = vmatpush1.bf16.xpose.msra.mxu0 0
        %509 = vmatprep.subr.bf16.mxu0 0
        %510 = vmatpush1.bf16.xpose.msra.mxu0 0
        %511 = vmatprep.subr.bf16.mxu0 %v428
        %512 = vmatpush1.bf16.xpose.msra.mxu0 %v427
        %513 = vmatprep.subr.bf16.mxu0 0
        %514 = vmatpush2.bf16.xpose.msra.mxu0 0
        %515 = vmatprep.subr.bf16.mxu0 0
        %516 = vmatpush2.bf16.xpose.msra.mxu0 0
        %517 = vmatprep.subr.bf16.mxu0 0
        %518 = vmatpush2.bf16.xpose.msra.mxu0 0
        %519 = vmatprep.subr.bf16.mxu0 0
        %520 = vmatpush2.bf16.xpose.msra.mxu0 0
        %521 = vmatprep.subr.bf16.mxu0 0
        %522 = vmatpush2.bf16.xpose.msra.mxu0 0
        %523 = vmatprep.subr.bf16.mxu0 0
        %524 = vmatpush2.bf16.xpose.msra.mxu0 0
        %525 = vmatprep.subr.bf16.mxu0 0
        %526 = vmatpush2.bf16.xpose.msra.mxu0 0
        %527 = vmatprep.subr.bf16.mxu0 0
        %528 = vmatpush2.bf16.xpose.msra.mxu0 0
        %529 = vmatprep.mubr.bf16.mxu0 %v310
        %530 = vmatmul.mubr.bf16.gmra.mxu0 %v308
        %v531 = vpop.f32.mrf.mxu0
        %v532 = vadd.f32 %v492, %v531
        %v533 = vpop.f32.mrf.mxu0
        %v534 = vpop.f32.mrf.mxu0
        %v535 = vpop.f32.mrf.mxu0
        %536 = vdwg.mxu0
        %537 = vmatprep.subr.bf16.mxu0 0
        %538 = vmatpush1.bf16.xpose.msra.mxu0 0
        %539 = vmatprep.subr.bf16.mxu0 0
        %540 = vmatpush1.bf16.xpose.msra.mxu0 0
        %541 = vmatprep.subr.bf16.mxu0 0
        %542 = vmatpush1.bf16.xpose.msra.mxu0 0
        %543 = vmatprep.subr.bf16.mxu0 0
        %544 = vmatpush1.bf16.xpose.msra.mxu0 0
        %545 = vmatprep.subr.bf16.mxu0 0
        %546 = vmatpush1.bf16.xpose.msra.mxu0 0
        %547 = vmatprep.subr.bf16.mxu0 0
        %548 = vmatpush1.bf16.xpose.msra.mxu0 0
        %549 = vmatprep.subr.bf16.mxu0 0
        %550 = vmatpush1.bf16.xpose.msra.mxu0 0
        %551 = vmatprep.subr.bf16.mxu0 %v430
        %552 = vmatpush1.bf16.xpose.msra.mxu0 %v429
        %553 = vmatprep.subr.bf16.mxu0 0
        %554 = vmatpush2.bf16.xpose.msra.mxu0 0
        %555 = vmatprep.subr.bf16.mxu0 0
        %556 = vmatpush2.bf16.xpose.msra.mxu0 0
        %557 = vmatprep.subr.bf16.mxu0 0
        %558 = vmatpush2.bf16.xpose.msra.mxu0 0
        %559 = vmatprep.subr.bf16.mxu0 0
        %560 = vmatpush2.bf16.xpose.msra.mxu0 0
        %561 = vmatprep.subr.bf16.mxu0 0
        %562 = vmatpush2.bf16.xpose.msra.mxu0 0
        %563 = vmatprep.subr.bf16.mxu0 0
        %564 = vmatpush2.bf16.xpose.msra.mxu0 0
        %565 = vmatprep.subr.bf16.mxu0 0
        %566 = vmatpush2.bf16.xpose.msra.mxu0 0
        %567 = vmatprep.subr.bf16.mxu0 0
        %568 = vmatpush2.bf16.xpose.msra.mxu0 0
        %569 = vmatprep.mubr.bf16.mxu0 %v307
        %570 = vmatmul.mubr.bf16.gmra.mxu0 %v293
        %v571 = vpop.f32.mrf.mxu0
        %v572 = vadd.f32 %v532, %v571
        %v573 = vpop.f32.mrf.mxu0
        %v574 = vpop.f32.mrf.mxu0
        %v575 = vpop.f32.mrf.mxu0
        %576 = vdwg.mxu0
        %577 = vmatprep.subr.bf16.mxu0 0
        %578 = vmatpush1.bf16.xpose.msra.mxu0 0
        %579 = vmatprep.subr.bf16.mxu0 0
        %580 = vmatpush1.bf16.xpose.msra.mxu0 0
        %581 = vmatprep.subr.bf16.mxu0 0
        %582 = vmatpush1.bf16.xpose.msra.mxu0 0
        %583 = vmatprep.subr.bf16.mxu0 0
        %584 = vmatpush1.bf16.xpose.msra.mxu0 0
        %585 = vmatprep.subr.bf16.mxu0 0
        %586 = vmatpush1.bf16.xpose.msra.mxu0 0
        %587 = vmatprep.subr.bf16.mxu0 0
        %588 = vmatpush1.bf16.xpose.msra.mxu0 0
        %589 = vmatprep.subr.bf16.mxu0 0
        %590 = vmatpush1.bf16.xpose.msra.mxu0 0
        %591 = vmatprep.subr.bf16.mxu0 %v432
        %592 = vmatpush1.bf16.xpose.msra.mxu0 %v431
        %593 = vmatprep.subr.bf16.mxu0 0
        %594 = vmatpush2.bf16.xpose.msra.mxu0 0
        %595 = vmatprep.subr.bf16.mxu0 0
        %596 = vmatpush2.bf16.xpose.msra.mxu0 0
        %597 = vmatprep.subr.bf16.mxu0 0
        %598 = vmatpush2.bf16.xpose.msra.mxu0 0
        %599 = vmatprep.subr.bf16.mxu0 0
        %600 = vmatpush2.bf16.xpose.msra.mxu0 0
        %601 = vmatprep.subr.bf16.mxu0 0
        %602 = vmatpush2.bf16.xpose.msra.mxu0 0
        %603 = vmatprep.subr.bf16.mxu0 0
        %604 = vmatpush2.bf16.xpose.msra.mxu0 0
        %605 = vmatprep.subr.bf16.mxu0 0
        %606 = vmatpush2.bf16.xpose.msra.mxu0 0
        %607 = vmatprep.subr.bf16.mxu0 0
        %608 = vmatpush2.bf16.xpose.msra.mxu0 0
        %609 = vmatprep.mubr.bf16.mxu0 %v311
        %610 = vmatmul.mubr.bf16.gmra.mxu0 %v309
        %v611 = vpop.f32.mrf.mxu0
        %v612 = vadd.f32 %v572, %v611
        %v613 = vpop.f32.mrf.mxu0
        %v614 = vpop.f32.mrf.mxu0
        %v615 = vpop.f32.mrf.mxu0
        %616 = vdwg.mxu0
        %617 = vmatprep.subr.bf16.mxu0 0
        %618 = vmatpush1.bf16.xpose.msra.mxu0 0
        %619 = vmatprep.subr.bf16.mxu0 0
        %620 = vmatpush1.bf16.xpose.msra.mxu0 0
        %621 = vmatprep.subr.bf16.mxu0 0
        %622 = vmatpush1.bf16.xpose.msra.mxu0 0
        %623 = vmatprep.subr.bf16.mxu0 0
        %624 = vmatpush1.bf16.xpose.msra.mxu0 0
        %625 = vmatprep.subr.bf16.mxu0 0
        %626 = vmatpush1.bf16.xpose.msra.mxu0 0
        %627 = vmatprep.subr.bf16.mxu0 0
        %628 = vmatpush1.bf16.xpose.msra.mxu0 0
        %629 = vmatprep.subr.bf16.mxu0 0
        %630 = vmatpush1.bf16.xpose.msra.mxu0 0
        %631 = vmatprep.subr.bf16.mxu0 %v434
        %632 = vmatpush1.bf16.xpose.msra.mxu0 %v433
        %633 = vmatprep.subr.bf16.mxu0 0
        %634 = vmatpush2.bf16.xpose.msra.mxu0 0
        %635 = vmatprep.subr.bf16.mxu0 0
        %636 = vmatpush2.bf16.xpose.msra.mxu0 0
        %637 = vmatprep.subr.bf16.mxu0 0
        %638 = vmatpush2.bf16.xpose.msra.mxu0 0
        %639 = vmatprep.subr.bf16.mxu0 0
        %640 = vmatpush2.bf16.xpose.msra.mxu0 0
        %641 = vmatprep.subr.bf16.mxu0 0
        %642 = vmatpush2.bf16.xpose.msra.mxu0 0
        %643 = vmatprep.subr.bf16.mxu0 0
        %644 = vmatpush2.bf16.xpose.msra.mxu0 0
        %645 = vmatprep.subr.bf16.mxu0 0
        %646 = vmatpush2.bf16.xpose.msra.mxu0 0
        %647 = vmatprep.subr.bf16.mxu0 0
        %648 = vmatpush2.bf16.xpose.msra.mxu0 0
        %649 = vmatprep.mubr.bf16.mxu0 %v349
        %650 = vmatmul.mubr.bf16.gmra.mxu0 %v335
        %v651 = vpop.f32.mrf.mxu0
        %v652 = vadd.f32 %v612, %v651
        %v653 = vpop.f32.mrf.mxu0
        %v654 = vpop.f32.mrf.mxu0
        %v655 = vpop.f32.mrf.mxu0
        %656 = vdwg.mxu0
        %657 = vmatprep.subr.bf16.mxu0 0
        %658 = vmatpush1.bf16.xpose.msra.mxu0 0
        %659 = vmatprep.subr.bf16.mxu0 0
        %660 = vmatpush1.bf16.xpose.msra.mxu0 0
        %661 = vmatprep.subr.bf16.mxu0 0
        %662 = vmatpush1.bf16.xpose.msra.mxu0 0
        %663 = vmatprep.subr.bf16.mxu0 0
        %664 = vmatpush1.bf16.xpose.msra.mxu0 0
        %665 = vmatprep.subr.bf16.mxu0 0
        %666 = vmatpush1.bf16.xpose.msra.mxu0 0
        %667 = vmatprep.subr.bf16.mxu0 0
        %668 = vmatpush1.bf16.xpose.msra.mxu0 0
        %669 = vmatprep.subr.bf16.mxu0 0
        %670 = vmatpush1.bf16.xpose.msra.mxu0 0
        %671 = vmatprep.subr.bf16.mxu0 %v436
        %672 = vmatpush1.bf16.xpose.msra.mxu0 %v435
        %673 = vmatprep.subr.bf16.mxu0 0
        %674 = vmatpush2.bf16.xpose.msra.mxu0 0
        %675 = vmatprep.subr.bf16.mxu0 0
        %676 = vmatpush2.bf16.xpose.msra.mxu0 0
        %677 = vmatprep.subr.bf16.mxu0 0
        %678 = vmatpush2.bf16.xpose.msra.mxu0 0
        %679 = vmatprep.subr.bf16.mxu0 0
        %680 = vmatpush2.bf16.xpose.msra.mxu0 0
        %681 = vmatprep.subr.bf16.mxu0 0
        %682 = vmatpush2.bf16.xpose.msra.mxu0 0
        %683 = vmatprep.subr.bf16.mxu0 0
        %684 = vmatpush2.bf16.xpose.msra.mxu0 0
        %685 = vmatprep.subr.bf16.mxu0 0
        %686 = vmatpush2.bf16.xpose.msra.mxu0 0
        %687 = vmatprep.subr.bf16.mxu0 0
        %688 = vmatpush2.bf16.xpose.msra.mxu0 0
        %689 = vmatprep.mubr.bf16.mxu0 %v359
        %690 = vmatmul.mubr.bf16.gmra.mxu0 %v357
        %v691 = vpop.f32.mrf.mxu0
        %v692 = vadd.f32 %v652, %v691
        %v693 = vpop.f32.mrf.mxu0
        %v694 = vpop.f32.mrf.mxu0
        %v695 = vpop.f32.mrf.mxu0
        %696 = vdwg.mxu0
        %697 = vmatprep.subr.bf16.mxu0 0
        %698 = vmatpush1.bf16.xpose.msra.mxu0 0
        %699 = vmatprep.subr.bf16.mxu0 0
        %700 = vmatpush1.bf16.xpose.msra.mxu0 0
        %701 = vmatprep.subr.bf16.mxu0 0
        %702 = vmatpush1.bf16.xpose.msra.mxu0 0
        %703 = vmatprep.subr.bf16.mxu0 0
        %704 = vmatpush1.bf16.xpose.msra.mxu0 0
        %705 = vmatprep.subr.bf16.mxu0 0
        %706 = vmatpush1.bf16.xpose.msra.mxu0 0
        %707 = vmatprep.subr.bf16.mxu0 0
        %708 = vmatpush1.bf16.xpose.msra.mxu0 0
        %709 = vmatprep.subr.bf16.mxu0 0
        %710 = vmatpush1.bf16.xpose.msra.mxu0 0
        %711 = vmatprep.subr.bf16.mxu0 %v438
        %712 = vmatpush1.bf16.xpose.msra.mxu0 %v437
        %713 = vmatprep.subr.bf16.mxu0 0
        %714 = vmatpush2.bf16.xpose.msra.mxu0 0
        %715 = vmatprep.subr.bf16.mxu0 0
        %716 = vmatpush2.bf16.xpose.msra.mxu0 0
        %717 = vmatprep.subr.bf16.mxu0 0
        %718 = vmatpush2.bf16.xpose.msra.mxu0 0
        %719 = vmatprep.subr.bf16.mxu0 0
        %720 = vmatpush2.bf16.xpose.msra.mxu0 0
        %721 = vmatprep.subr.bf16.mxu0 0
        %722 = vmatpush2.bf16.xpose.msra.mxu0 0
        %723 = vmatprep.subr.bf16.mxu0 0
        %724 = vmatpush2.bf16.xpose.msra.mxu0 0
        %725 = vmatprep.subr.bf16.mxu0 0
        %726 = vmatpush2.bf16.xpose.msra.mxu0 0
        %727 = vmatprep.subr.bf16.mxu0 0
        %728 = vmatpush2.bf16.xpose.msra.mxu0 0
        %729 = vmatprep.mubr.bf16.mxu0 %v356
        %730 = vmatmul.mubr.bf16.gmra.mxu0 %v342
        %v731 = vpop.f32.mrf.mxu0
        %v732 = vadd.f32 %v692, %v731
        %v733 = vpop.f32.mrf.mxu0
        %v734 = vpop.f32.mrf.mxu0
        %v735 = vpop.f32.mrf.mxu0
        %736 = vdwg.mxu0
        %737 = vmatprep.subr.bf16.mxu0 0
        %738 = vmatpush1.bf16.xpose.msra.mxu0 0
        %739 = vmatprep.subr.bf16.mxu0 0
        %740 = vmatpush1.bf16.xpose.msra.mxu0 0
        %741 = vmatprep.subr.bf16.mxu0 0
        %742 = vmatpush1.bf16.xpose.msra.mxu0 0
        %743 = vmatprep.subr.bf16.mxu0 0
        %744 = vmatpush1.bf16.xpose.msra.mxu0 0
        %745 = vmatprep.subr.bf16.mxu0 0
        %746 = vmatpush1.bf16.xpose.msra.mxu0 0
        %747 = vmatprep.subr.bf16.mxu0 0
        %748 = vmatpush1.bf16.xpose.msra.mxu0 0
        %749 = vmatprep.subr.bf16.mxu0 0
        %750 = vmatpush1.bf16.xpose.msra.mxu0 0
        %751 = vmatprep.subr.bf16.mxu0 %v440
        %752 = vmatpush1.bf16.xpose.msra.mxu0 %v439
        %753 = vmatprep.subr.bf16.mxu0 0
        %754 = vmatpush2.bf16.xpose.msra.mxu0 0
        %755 = vmatprep.subr.bf16.mxu0 0
        %756 = vmatpush2.bf16.xpose.msra.mxu0 0
        %757 = vmatprep.subr.bf16.mxu0 0
        %758 = vmatpush2.bf16.xpose.msra.mxu0 0
        %759 = vmatprep.subr.bf16.mxu0 0
        %760 = vmatpush2.bf16.xpose.msra.mxu0 0
        %761 = vmatprep.subr.bf16.mxu0 0
        %762 = vmatpush2.bf16.xpose.msra.mxu0 0
        %763 = vmatprep.subr.bf16.mxu0 0
        %764 = vmatpush2.bf16.xpose.msra.mxu0 0
        %765 = vmatprep.subr.bf16.mxu0 0
        %766 = vmatpush2.bf16.xpose.msra.mxu0 0
        %767 = vmatprep.subr.bf16.mxu0 0
        %768 = vmatpush2.bf16.xpose.msra.mxu0 0
        %769 = vmatprep.mubr.bf16.mxu0 %v360
        %770 = vmatmul.mubr.bf16.gmra.mxu0 %v358
        %v771 = vpop.f32.mrf.mxu0
        %v772 = vadd.f32 %v732, %v771
        %v773 = vpop.f32.mrf.mxu0
        %v774 = vpop.f32.mrf.mxu0
        %v775 = vpop.f32.mrf.mxu0
        %776 = vdwg.mxu0
        %v777 = vadd.f32 %v242, %v772
        %vm778 = vcmask 123904
        %779 = vst.msk [vmem:[#allocation2] sm:$0x3] %vm778, %v777
        // Predicated region
        $region56: #{main_model_forward.3} parent=46 // pred_check
          %p780 = pneg %p236
        $region57: #{main_model_forward.3} parent=46 // pred_check_branch
          %782 = sbr.rel (%p780) target = $region59
        $region58: #{main_model_forward.3} parent=46 // pred_region
          %v783 = vld [vmem:[#allocation2] sm:$0x3]
          %784 = vst.msk [vmem:[%s234] sm:$0x3] %vm778, %v783
        $region59: #{main_model_forward.3} parent=46 // pred_fallthru
          _
        %p785 = scmp.lt.s32.totalorder %s17, 1
        %s786 = scalar_select %p785, %s17, 1
        %s787 = smul.addr %s786, 2
        %s788 = scalar_lea.vmem %s2, %s787
        // Predicated region
        $region60: #{main_model_forward.3} parent=46 // pred_check
          %p789 = pneg %p99
        $region61: #{main_model_forward.3} parent=46 // pred_check_branch
          %791 = sbr.rel (%p789) target = $region63
        $region62: #{main_model_forward.3} parent=46 // pred_region
          _
        $region63: #{main_model_forward.3} parent=46 // pred_fallthru
          _
      $region47: #{main_model_forward.3} parent=5 // pred_fallthru
        _
      %p792 = scmp.le.s32.totalorder 2, %s8
      // Predicated region
      $region64: #{main_model_forward.3} parent=5 // pred_check
        %p793 = pneg %p792
      $region65: #{main_model_forward.3} parent=5 // pred_check_branch
        %795 = sbr.rel (%p793) target = $region67
      $region66: #{main_model_forward.3} parent=5 // pred_region
        %s796 = ssub.s32 %s8, 2
        // Predicated region
        $region68: #{main_model_forward.3} parent=66 // pred_check
          %p797 = pneg %p105
        $region69: #{main_model_forward.3} parent=66 // pred_check_branch
          %799 = sbr.rel (%p797) target = $region71
        $region70: #{main_model_forward.3} parent=66 // pred_region
          %p800 = scmp.lt.s32.totalorder %s19, 1
          %s801 = scalar_select %p800, %s19, 1
          %s802 = smul.addr %s801, 2
          %s803 = scalar_lea.vmem %s2, %s802
        $region71: #{main_model_forward.3} parent=66 // pred_fallthru
          _
      $region67: #{main_model_forward.3} parent=5 // pred_fallthru
        _
    $region6: #{main_model_forward.3} parent=1 // loop_footer
      %s12 = sadd.s32 1, %s8
    $region7: #{main_model_forward.3} parent=1 // loop_footer_branch
      %7 = sbr.rel target = $region3
    $region8: #{main_model_forward.3} parent=1 // loop_exit
      _

</llo_original>
